<compile_context>
chip_gen: v7x
topology: tpu7x:2x2x1
jax: 0.10.0
libtpu: 0.0.40
codegen_flags: <defaults>
</compile_context>

<pallas_src>
import functools

import jax
import jax.numpy as jnp
import numpy as np
from jax.experimental import pallas as pl
from jax.experimental.pallas import tpu as pltpu

_BIG = 1e30        # knock-out sentinel for already-selected entries
_KPAD = 128        # lane-dense padding of the per-row top-k index output
_ROW_ALIGN = 8     # f32 / int32 sublane tiling

_ARGMAX_OK = None    # lazily determined: can Mosaic lower jnp.argmax?
_VMEM_PARAMS = None  # cached (tile budget, vmem_limit_bytes)


def _round_up(x, m):
    return ((x + m - 1) // m) * m


def _pad_rows(x, rows_pad):
    pad = rows_pad - x.shape[0]
    if pad:
        x = jnp.pad(x, ((0, pad), (0, 0)))
    return x


def _vmem_params():
    """(tile-picking budget, vmem_limit_bytes) derived from physical VMEM."""
    global _VMEM_PARAMS
    if _VMEM_PARAMS is None:
        cap = 64 * 1024 * 1024            # conservative default (v7x per-core VMEM)
        try:
            cap = int(pltpu.get_tpu_info().vmem_capacity_bytes)
        except Exception:
            pass
        limit = max(min(cap // 2, 64 * 1024 * 1024), 16 * 1024 * 1024)
        budget = (limit * 3) // 4          # headroom for compiler temporaries
        _VMEM_PARAMS = (budget, limit)
    return _VMEM_PARAMS


def _pick_tile(n, m, c, budget):
    """Largest row tile whose double-buffered blocks + working set fit `budget`."""
    tile = 32
    for cand in (512, 256, 128, 64, 32):
        est = (2 * m * c * 4              # resident B operand (double-buffered)
               + 2 * cand * c * 4         # A row tile (double-buffered)
               + 2 * cand * _KPAD * 4     # index output tile (double-buffered)
               + 6 * cand * m * 4)        # xy / knock-out / one-hot working set
        if est <= budget:
            tile = cand
            break
    return min(tile, _round_up(n, _ROW_ALIGN))


def _topk_idx_kernel(a_ref, b_ref, idx_ref, *, k, use_argmax):
    """Per-row indices of the k largest entries of a @ b.T (== k smallest scores)."""
    a = a_ref[...].astype(jnp.float32)
    b = b_ref[...].astype(jnp.float32)
    # Raw inner products; sqrt(max(2-2xy,0)+eps) is monotone decreasing in xy,
    # so no sqrt / clamp is needed in the selection hot path.
    xy = jax.lax.dot_general(a, b, (((1,), (1,)), ((), ())),
                             preferred_element_type=jnp.float32)   # (tile, M)
    rows, m = xy.shape
    kpad = idx_ref.shape[1]
    col_iota = jax.lax.broadcasted_iota(jnp.int32, (1, m), 1)
    out_iota = jax.lax.broadcasted_iota(jnp.int32, (1, kpad), 1)
    idx_acc = jnp.zeros((rows, kpad), jnp.int32)
    w = xy
    for q in range(k):
        if use_argmax:
            # single lane-reduce per iteration; first occurrence == lowest index
            j = jnp.argmax(w, axis=1, keepdims=True).astype(jnp.int32)   # (rows, 1)
        else:
            # fallback: two lane-reduces (max value, then first index of the max)
            row_max = jnp.max(w, axis=1, keepdims=True)
            j = jnp.min(jnp.where(w == row_max, col_iota, m),
                        axis=1, keepdims=True)
        onehot = col_iota == j
        w = jnp.where(onehot, -_BIG, w)
        idx_acc = jnp.where(out_iota == q, j, idx_acc)
    idx_ref[...] = idx_acc   # one unmasked, lane-dense (tile, 128) store


def _row_topk_pass(a, b, k):
    """Row-tiled pass: for each row of `a`, top-k column indices of a @ b.T."""
    global _ARGMAX_OK
    n, c = a.shape
    m = b.shape[0]
    budget, vmem_limit = _vmem_params()
    tile = _pick_tile(n, m, c, budget)
    n_pad = _round_up(n, tile)
    a_p = _pad_rows(a, n_pad)
    kpad = _round_up(max(k, 1), _KPAD)

    def build(use_argmax):
        return pl.pallas_call(
            functools.partial(_topk_idx_kernel, k=k, use_argmax=use_argmax),
            grid=(n_pad // tile,),
            in_specs=[
                pl.BlockSpec((tile, c), lambda i: (i, 0)),
                pl.BlockSpec((m, c), lambda i: (0, 0)),   # resident across tiles
            ],
            out_specs=pl.BlockSpec((tile, kpad), lambda i: (i, 0)),
            out_shape=jax.ShapeDtypeStruct((n_pad, kpad), jnp.int32),
            compiler_params=pltpu.CompilerParams(
                dimension_semantics=("parallel",),
                vmem_limit_bytes=vmem_limit),
        )(a_p, b)

    if _ARGMAX_OK is None:
        try:
            out = build(True)
            jax.block_until_ready(out)
            _ARGMAX_OK = True
        except Exception:
            _ARGMAX_OK = False
            out = build(False)
    else:
        out = build(_ARGMAX_OK)
    return out[:n, :k]


class SuperPointMatchingMutualTopk:
    def __init__(self, num_correspondences, k, threshold=None, sample_num=2048,
                 mutual=True, eps=1e-8):
        self.num_correspondences = num_correspondences
        self.k = k
        self.threshold = threshold
        self.mutual = mutual
        self.eps = eps
        self.sample_num = sample_num

    def __call__(self, src_feats, tgt_feats, src_masks=None, tgt_masks=None):
        if src_masks is not None or tgt_masks is not None:
            # TODO(synk): boolean-mask gather (src_feats[src_masks]) is dynamically
            # shaped; not representable in this static Pallas port.
            raise NotImplementedError("src_masks / tgt_masks not supported in Pallas port")
        if self.threshold is not None:
            # TODO(synk): threshold re-filtering branch uses .cpu()/print and dynamic shapes.
            raise NotImplementedError("threshold path not supported in Pallas port")

        n = src_feats.shape[0]
        m = tgt_feats.shape[0]
        k = self.k

        # Pass 1: per-src-row top-k tgt indices.  Pass 2: per-tgt-row top-k src indices.
        row_idx = _row_topk_pass(src_feats, tgt_feats, k)   # (n, k) int32
        col_idx = _row_topk_pass(tgt_feats, src_feats, k)   # (m, k) int32

        if self.mutual:
            # keep (i, j = row_idx[i, q]) iff i is also among column j's top-k
            back = col_idx[row_idx]                                          # (n, k, k)
            valid = jnp.any(back == jnp.arange(n)[:, None, None], axis=-1)   # (n, k)
            pos = jnp.nonzero(valid.reshape(-1), size=n * k, fill_value=0)[0]
            src_corr_indices = (pos // k).astype(jnp.int32)
            tgt_corr_indices = row_idx.reshape(-1)[pos]
        else:
            row_src = jnp.repeat(jnp.arange(n, dtype=jnp.int32), k)
            row_tgt = row_idx.reshape(-1)
            col_src = col_idx.reshape(-1)
            col_tgt = jnp.repeat(jnp.arange(m, dtype=jnp.int32), k)
            # a column pair (col_idx[j,q], j) duplicates a row pair iff
            # j is among row_idx[col_idx[j,q]]
            dup = jnp.any(row_idx[col_idx] == jnp.arange(m)[:, None, None], axis=-1)
            valid = jnp.concatenate(
                [jnp.ones((n * k,), jnp.bool_), jnp.logical_not(dup).reshape(-1)])
            src_all = jnp.concatenate([row_src, col_src])
            tgt_all = jnp.concatenate([row_tgt, col_tgt])
            pos = jnp.nonzero(valid, size=(n + m) * k, fill_value=0)[0]
            src_corr_indices = src_all[pos]
            tgt_corr_indices = tgt_all[pos]
        num_corr = jnp.sum(valid)

        # Recompute the <= (n+m)*k selected scores in plain JAX (tiny gather + reduce).
        s = src_feats[src_corr_indices].astype(jnp.float32)
        t = tgt_feats[tgt_corr_indices].astype(jnp.float32)
        xy = jnp.sum(s * t, axis=-1)
        corr_scores = jnp.sqrt(jnp.maximum(2.0 - 2.0 * xy, 0.0) + self.eps)
        # Entries beyond num_corr are padding (they point at pair (0, row_idx[0,0])).
        return src_corr_indices, tgt_corr_indices, corr_scores, num_corr


if __name__ == "__main__":
    key = jax.random.PRNGKey(0)
    n, m, c, k = 64, 48, 32, 3
    k1, k2 = jax.random.split(key)
    src = jax.random.normal(k1, (n, c), jnp.float32)
    tgt = jax.random.normal(k2, (m, c), jnp.float32)
    # Superpoint features are L2-normalized upstream in GeoTransformer.
    src = src / jnp.linalg.norm(src, axis=-1, keepdims=True)
    tgt = tgt / jnp.linalg.norm(tgt, axis=-1, keepdims=True)

    matcher = SuperPointMatchingMutualTopk(num_correspondences=256, k=k, mutual=True)
    src_idx, tgt_idx, scores, num_corr = matcher(src, tgt)
    jax.block_until_ready((src_idx, tgt_idx, scores, num_corr))

    # ---- pure-JAX reference check ----
    xy = src @ tgt.T
    score_ref = jnp.sqrt(jnp.maximum(2.0 - 2.0 * xy, 0.0) + 1e-8)
    row_top = jax.lax.top_k(-score_ref, k)[1]          # (n, k)
    col_top = jax.lax.top_k(-score_ref.T, k)[1]        # (m, k)
    row_mat = jnp.zeros((n, m), bool).at[jnp.arange(n)[:, None], row_top].set(True)
    col_mat = jnp.zeros((n, m), bool).at[col_top, jnp.arange(m)[:, None]].set(True)
    ref_mask = jnp.logical_and(row_mat, col_mat)

    nc = int(num_corr)
    assert int(jnp.sum(ref_mask)) == nc, (int(jnp.sum(ref_mask)), nc)
    assert bool(jnp.all(ref_mask[src_idx[:nc], tgt_idx[:nc]]))
    pair_ids = np.asarray(src_idx[:nc]) * m + np.asarray(tgt_idx[:nc])
    assert len(np.unique(pair_ids)) == nc
    ref_scores = score_ref[src_idx[:nc], tgt_idx[:nc]]
    np.testing.assert_allclose(
        np.asarray(scores[:nc]), np.asarray(ref_scores), rtol=1e-5, atol=1e-5
    )
    print("KERNEL_OK")
</pallas_src>

<mosaic_0001>
module attributes {stable_mosaic.version = 11 : i64} {
  func.func @_topk_idx_kernel(%arg0: i32, %arg1: memref<64x32xf32, #tpu.memory_space<vmem>>, %arg2: memref<48x32xf32, #tpu.memory_space<vmem>>, %arg3: memref<64x128xi32, #tpu.memory_space<vmem>>) attributes {dimension_semantics = [#tpu.dimension_semantics<parallel>], iteration_bounds = array<i64: 1>, scalar_prefetch = 0 : i64, scratch_operands = 0 : i64, tpu.core_type = #tpu.core_type<tc>, window_params = [{transform_indices = @transform_0, window_bounds = array<i64: 64, 32>}, {pipeline_mode = #tpu.pipeline_mode<synchronous>, transform_indices = @transform_1, window_bounds = array<i64: 48, 32>}, {transform_indices = @transform_2, window_bounds = array<i64: 64, 128>}]} {
    %c0 = arith.constant 0 : index
    %c0_0 = arith.constant 0 : index
    %0 = vector.load %arg1[%c0, %c0_0] : memref<64x32xf32, #tpu.memory_space<vmem>>, vector<64x32xf32>
    %c0_1 = arith.constant 0 : index
    %c0_2 = arith.constant 0 : index
    %1 = vector.load %arg2[%c0_1, %c0_2] : memref<48x32xf32, #tpu.memory_space<vmem>>, vector<48x32xf32>
    %cst = arith.constant dense<0.000000e+00> : vector<64x48xf32>
    %2 = tpu.matmul %0, %1, %cst {dimension_numbers = #tpu.dot_dimension_numbers<[1], [1], [0], [0], [0, 0, 1, 0], [], []>} : vector<64x32xf32>, vector<48x32xf32>, vector<64x48xf32> -> vector<64x48xf32>
    %3 = tpu.iota {dimensions = array<i32: 1>} : vector<1x48xi32>
    %4 = tpu.iota {dimensions = array<i32: 1>} : vector<1x128xi32>
    %c0_i32 = arith.constant 0 : i32
    %5 = vector.broadcast %c0_i32 : i32 to vector<64x128xi32>
    %6 = tpu.reduce_index %2 {axis = 1 : i32, kind = #tpu.reduction_kind<arg_max>} : vector<64x48xf32> -> vector<64xi32>
    %7 = vector.shape_cast %6 : vector<64xi32> to vector<64x1xi32>
    %8 = vector.broadcast %3 : vector<1x48xi32> to vector<64x48xi32>
    %9 = vector.broadcast %7 : vector<64x1xi32> to vector<64x48xi32>
    %10 = arith.cmpi eq, %8, %9 : vector<64x48xi32>
    %cst_3 = arith.constant -1.000000e+30 : f32
    %11 = vector.broadcast %cst_3 : f32 to vector<64x48xf32>
    %12 = arith.select %10, %11, %2 : vector<64x48xi1>, vector<64x48xf32>
    %c0_i32_4 = arith.constant 0 : i32
    %13 = vector.broadcast %c0_i32_4 : i32 to vector<1x128xi32>
    %14 = arith.cmpi eq, %4, %13 : vector<1x128xi32>
    %15 = vector.shape_cast %14 : vector<1x128xi1> to vector<1x128xi1>
    %16 = vector.broadcast %15 : vector<1x128xi1> to vector<64x128xi1>
    %17 = vector.shape_cast %7 : vector<64x1xi32> to vector<64x1xi32>
    %18 = vector.broadcast %17 : vector<64x1xi32> to vector<64x128xi32>
    %19 = arith.select %16, %18, %5 : vector<64x128xi1>, vector<64x128xi32>
    %20 = tpu.reduce_index %12 {axis = 1 : i32, kind = #tpu.reduction_kind<arg_max>} : vector<64x48xf32> -> vector<64xi32>
    %21 = vector.shape_cast %20 : vector<64xi32> to vector<64x1xi32>
    %22 = vector.broadcast %3 : vector<1x48xi32> to vector<64x48xi32>
    %23 = vector.broadcast %21 : vector<64x1xi32> to vector<64x48xi32>
    %24 = arith.cmpi eq, %22, %23 : vector<64x48xi32>
    %cst_5 = arith.constant -1.000000e+30 : f32
    %25 = vector.broadcast %cst_5 : f32 to vector<64x48xf32>
    %26 = arith.select %24, %25, %12 : vector<64x48xi1>, vector<64x48xf32>
    %c1_i32 = arith.constant 1 : i32
    %27 = vector.broadcast %c1_i32 : i32 to vector<1x128xi32>
    %28 = arith.cmpi eq, %4, %27 : vector<1x128xi32>
    %29 = vector.shape_cast %28 : vector<1x128xi1> to vector<1x128xi1>
    %30 = vector.broadcast %29 : vector<1x128xi1> to vector<64x128xi1>
    %31 = vector.shape_cast %21 : vector<64x1xi32> to vector<64x1xi32>
    %32 = vector.broadcast %31 : vector<64x1xi32> to vector<64x128xi32>
    %33 = arith.select %30, %32, %19 : vector<64x128xi1>, vector<64x128xi32>
    %34 = tpu.reduce_index %26 {axis = 1 : i32, kind = #tpu.reduction_kind<arg_max>} : vector<64x48xf32> -> vector<64xi32>
    %35 = vector.shape_cast %34 : vector<64xi32> to vector<64x1xi32>
    %c2_i32 = arith.constant 2 : i32
    %36 = vector.broadcast %c2_i32 : i32 to vector<1x128xi32>
    %37 = arith.cmpi eq, %4, %36 : vector<1x128xi32>
    %38 = vector.shape_cast %37 : vector<1x128xi1> to vector<1x128xi1>
    %39 = vector.broadcast %38 : vector<1x128xi1> to vector<64x128xi1>
    %40 = vector.shape_cast %35 : vector<64x1xi32> to vector<64x1xi32>
    %41 = vector.broadcast %40 : vector<64x1xi32> to vector<64x128xi32>
    %42 = arith.select %39, %41, %33 : vector<64x128xi1>, vector<64x128xi32>
    %c0_6 = arith.constant 0 : index
    %c0_7 = arith.constant 0 : index
    %43 = vector.load %arg3[%c0_6, %c0_7] : memref<64x128xi32, #tpu.memory_space<vmem>>, vector<64x128xi32>
    tpu.vector_store %arg3[%c0_6, %c0_7], %42 {strides = array<i32>} : memref<64x128xi32, #tpu.memory_space<vmem>>, vector<64x128xi32>,
    return
  }
  func.func @transform_0(%arg0: i32) -> (i32, i32) {
    %c0_i32 = arith.constant 0 : i32
    %c0_i32_0 = arith.constant 0 : i32
    return %arg0, %c0_i32 : i32, i32
  }
  func.func @transform_1(%arg0: i32) -> (i32, i32) {
    %c0_i32 = arith.constant 0 : i32
    %c0_i32_0 = arith.constant 0 : i32
    %c0_i32_1 = arith.constant 0 : i32
    return %c0_i32, %c0_i32_0 : i32, i32
  }
  func.func @transform_2(%arg0: i32) -> (i32, i32) {
    %c0_i32 = arith.constant 0 : i32
    %c0_i32_0 = arith.constant 0 : i32
    return %arg0, %c0_i32 : i32, i32
  }
}

module attributes {stable_mosaic.version = 11 : i64} {
  func.func @_topk_idx_kernel(%arg0: i32, %arg1: memref<64x32xf32, #tpu.memory_space<vmem>>, %arg2: memref<48x32xf32, #tpu.memory_space<vmem>>, %arg3: memref<64x128xi32, #tpu.memory_space<vmem>>) attributes {dimension_semantics = [#tpu.dimension_semantics<parallel>], iteration_bounds = array<i64: 1>, scalar_prefetch = 0 : i64, scratch_operands = 0 : i64, tpu.core_type = #tpu.core_type<tc>, window_params = [{transform_indices = @transform_0, window_bounds = array<i64: 64, 32>}, {pipeline_mode = #tpu.pipeline_mode<synchronous>, transform_indices = @transform_1, window_bounds = array<i64: 48, 32>}, {transform_indices = @transform_2, window_bounds = array<i64: 64, 128>}]} {
    %c0 = arith.constant 0 : index
    %c0_0 = arith.constant 0 : index
    %0 = vector.load %arg1[%c0, %c0_0] : memref<64x32xf32, #tpu.memory_space<vmem>>, vector<64x32xf32>
    %c0_1 = arith.constant 0 : index
    %c0_2 = arith.constant 0 : index
    %1 = vector.load %arg2[%c0_1, %c0_2] : memref<48x32xf32, #tpu.memory_space<vmem>>, vector<48x32xf32>
    %cst = arith.constant dense<0.000000e+00> : vector<64x48xf32>
    %2 = tpu.matmul %0, %1, %cst {dimension_numbers = #tpu.dot_dimension_numbers<[1], [1], [0], [0], [0, 0, 1, 0], [], []>} : vector<64x32xf32>, vector<48x32xf32>, vector<64x48xf32> -> vector<64x48xf32>
    %3 = tpu.iota {dimensions = array<i32: 1>} : vector<1x48xi32>
    %4 = tpu.iota {dimensions = array<i32: 1>} : vector<1x128xi32>
    %c0_i32 = arith.constant 0 : i32
    %5 = vector.broadcast %c0_i32 : i32 to vector<64x128xi32>
    %cst_3 = arith.constant dense<0xFF800000> : vector<64xf32>
    %6 = vector.multi_reduction <maximumf>, %2, %cst_3 [1] : vector<64x48xf32> to vector<64xf32>
    %7 = vector.shape_cast %6 : vector<64xf32> to vector<64x1xf32>
    %8 = vector.broadcast %7 : vector<64x1xf32> to vector<64x48xf32>
    %9 = arith.cmpf oeq, %2, %8 : vector<64x48xf32>
    %c48_i32 = arith.constant 48 : i32
    %10 = vector.shape_cast %3 : vector<1x48xi32> to vector<1x48xi32>
    %11 = vector.broadcast %10 : vector<1x48xi32> to vector<64x48xi32>
    %12 = vector.broadcast %c48_i32 : i32 to vector<64x48xi32>
    %13 = arith.select %9, %11, %12 : vector<64x48xi1>, vector<64x48xi32>
    %cst_4 = arith.constant dense<2147483647> : vector<64xi32>
    %14 = vector.multi_reduction <minsi>, %13, %cst_4 [1] : vector<64x48xi32> to vector<64xi32>
    %15 = vector.shape_cast %14 : vector<64xi32> to vector<64x1xi32>
    %16 = vector.broadcast %3 : vector<1x48xi32> to vector<64x48xi32>
    %17 = vector.broadcast %15 : vector<64x1xi32> to vector<64x48xi32>
    %18 = arith.cmpi eq, %16, %17 : vector<64x48xi32>
    %cst_5 = arith.constant -1.000000e+30 : f32
    %19 = vector.broadcast %cst_5 : f32 to vector<64x48xf32>
    %20 = arith.select %18, %19, %2 : vector<64x48xi1>, vector<64x48xf32>
    %c0_i32_6 = arith.constant 0 : i32
    %21 = vector.broadcast %c0_i32_6 : i32 to vector<1x128xi32>
    %22 = arith.cmpi eq, %4, %21 : vector<1x128xi32>
    %23 = vector.shape_cast %22 : vector<1x128xi1> to vector<1x128xi1>
    %24 = vector.broadcast %23 : vector<1x128xi1> to vector<64x128xi1>
    %25 = vector.shape_cast %15 : vector<64x1xi32> to vector<64x1xi32>
    %26 = vector.broadcast %25 : vector<64x1xi32> to vector<64x128xi32>
    %27 = arith.select %24, %26, %5 : vector<64x128xi1>, vector<64x128xi32>
    %cst_7 = arith.constant dense<0xFF800000> : vector<64xf32>
    %28 = vector.multi_reduction <maximumf>, %20, %cst_7 [1] : vector<64x48xf32> to vector<64xf32>
    %29 = vector.shape_cast %28 : vector<64xf32> to vector<64x1xf32>
    %30 = vector.broadcast %29 : vector<64x1xf32> to vector<64x48xf32>
    %31 = arith.cmpf oeq, %20, %30 : vector<64x48xf32>
    %c48_i32_8 = arith.constant 48 : i32
    %32 = vector.shape_cast %3 : vector<1x48xi32> to vector<1x48xi32>
    %33 = vector.broadcast %32 : vector<1x48xi32> to vector<64x48xi32>
    %34 = vector.broadcast %c48_i32_8 : i32 to vector<64x48xi32>
    %35 = arith.select %31, %33, %34 : vector<64x48xi1>, vector<64x48xi32>
    %cst_9 = arith.constant dense<2147483647> : vector<64xi32>
    %36 = vector.multi_reduction <minsi>, %35, %cst_9 [1] : vector<64x48xi32> to vector<64xi32>
    %37 = vector.shape_cast %36 : vector<64xi32> to vector<64x1xi32>
    %38 = vector.broadcast %3 : vector<1x48xi32> to vector<64x48xi32>
    %39 = vector.broadcast %37 : vector<64x1xi32> to vector<64x48xi32>
    %40 = arith.cmpi eq, %38, %39 : vector<64x48xi32>
    %cst_10 = arith.constant -1.000000e+30 : f32
    %41 = vector.broadcast %cst_10 : f32 to vector<64x48xf32>
    %42 = arith.select %40, %41, %20 : vector<64x48xi1>, vector<64x48xf32>
    %c1_i32 = arith.constant 1 : i32
    %43 = vector.broadcast %c1_i32 : i32 to vector<1x128xi32>
    %44 = arith.cmpi eq, %4, %43 : vector<1x128xi32>
    %45 = vector.shape_cast %44 : vector<1x128xi1> to vector<1x128xi1>
    %46 = vector.broadcast %45 : vector<1x128xi1> to vector<64x128xi1>
    %47 = vector.shape_cast %37 : vector<64x1xi32> to vector<64x1xi32>
    %48 = vector.broadcast %47 : vector<64x1xi32> to vector<64x128xi32>
    %49 = arith.select %46, %48, %27 : vector<64x128xi1>, vector<64x128xi32>
    %cst_11 = arith.constant dense<0xFF800000> : vector<64xf32>
    %50 = vector.multi_reduction <maximumf>, %42, %cst_11 [1] : vector<64x48xf32> to vector<64xf32>
    %51 = vector.shape_cast %50 : vector<64xf32> to vector<64x1xf32>
    %52 = vector.broadcast %51 : vector<64x1xf32> to vector<64x48xf32>
    %53 = arith.cmpf oeq, %42, %52 : vector<64x48xf32>
    %c48_i32_12 = arith.constant 48 : i32
    %54 = vector.shape_cast %3 : vector<1x48xi32> to vector<1x48xi32>
    %55 = vector.broadcast %54 : vector<1x48xi32> to vector<64x48xi32>
    %56 = vector.broadcast %c48_i32_12 : i32 to vector<64x48xi32>
    %57 = arith.select %53, %55, %56 : vector<64x48xi1>, vector<64x48xi32>
    %cst_13 = arith.constant dense<2147483647> : vector<64xi32>
    %58 = vector.multi_reduction <minsi>, %57, %cst_13 [1] : vector<64x48xi32> to vector<64xi32>
    %59 = vector.shape_cast %58 : vector<64xi32> to vector<64x1xi32>
    %c2_i32 = arith.constant 2 : i32
    %60 = vector.broadcast %c2_i32 : i32 to vector<1x128xi32>
    %61 = arith.cmpi eq, %4, %60 : vector<1x128xi32>
    %62 = vector.shape_cast %61 : vector<1x128xi1> to vector<1x128xi1>
    %63 = vector.broadcast %62 : vector<1x128xi1> to vector<64x128xi1>
    %64 = vector.shape_cast %59 : vector<64x1xi32> to vector<64x1xi32>
    %65 = vector.broadcast %64 : vector<64x1xi32> to vector<64x128xi32>
    %66 = arith.select %63, %65, %49 : vector<64x128xi1>, vector<64x128xi32>
    %c0_14 = arith.constant 0 : index
    %c0_15 = arith.constant 0 : index
    %67 = vector.load %arg3[%c0_14, %c0_15] : memref<64x128xi32, #tpu.memory_space<vmem>>, vector<64x128xi32>
    tpu.vector_store %arg3[%c0_14, %c0_15], %66 {strides = array<i32>} : memref<64x128xi32, #tpu.memory_space<vmem>>, vector<64x128xi32>,
    return
  }
  func.func @transform_0(%arg0: i32) -> (i32, i32) {
    %c0_i32 = arith.constant 0 : i32
    %c0_i32_0 = arith.constant 0 : i32
    return %arg0, %c0_i32 : i32, i32
  }
  func.func @transform_1(%arg0: i32) -> (i32, i32) {
    %c0_i32 = arith.constant 0 : i32
    %c0_i32_0 = arith.constant 0 : i32
    %c0_i32_1 = arith.constant 0 : i32
    return %c0_i32, %c0_i32_0 : i32, i32
  }
  func.func @transform_2(%arg0: i32) -> (i32, i32) {
    %c0_i32 = arith.constant 0 : i32
    %c0_i32_0 = arith.constant 0 : i32
    return %arg0, %c0_i32 : i32, i32
  }
}

</mosaic_0001>

<llo_original>
// kernel: tpu_custom_call.1
$region0: #{tpu_custom_call.1}
  #allocation0 [shape = 'u32[]', space=smem, size = 0x4, offset = 0x4, fixed_abs, tag = 'smem constant byte address 0x4 - core index']
  #allocation1 [shape = 'u32[144,128]{1,0:T(1,128)}', space=vmem, size = 0x12000, scoped, tag = 'internal scratch']
  %s0 = inlined_call_operand.vmem [shape: f32[64,32], index: 0, kind: input, shape index: {}]
  %s1 = inlined_call_operand.vmem [shape: f32[48,32], index: 1, kind: input, shape index: {}]
  %s2 = inlined_call_operand.hbm [shape: s32[64,128], index: 2, kind: output, shape index: {}]
  %s3 = sld [smem:[#allocation0]]
  $region18: #{tpu_custom_call.1} parent=0
    _
  %s5 = ssub.s32 1, %s3
  %s6 = scalar_select 0, %s5, %s3
  $region1: #{tpu_custom_call.1} parent=0
    #allocation2 [shape = 'u8[32768]{0}', space=vmem, size = 0x8000, scoped, tag = 'output window, operand 0, single buffered']
    #allocation3 [shape = 's32[1]{0}', space=sflag, size = 0x4, scoped, tag = 'scoped memory for tpu_custom_call.1']
    %7 = vsyncpa [#allocation3], 0
    // Predicated region
    $region2: #{tpu_custom_call.1} parent=1 // pred_check
      _
    $region3: #{tpu_custom_call.1} parent=1 // pred_check_branch
      %9 = sbr.rel (0) target = $region5
    $region4: #{tpu_custom_call.1} parent=1 // pred_region
      _
    $region5: #{tpu_custom_call.1} parent=1 // pred_fallthru
      _
    // Predicated region
    $region6: #{tpu_custom_call.1} parent=1 // pred_check
      _
    $region7: #{tpu_custom_call.1} parent=1 // pred_check_branch
      %11 = sbr.rel (0) target = $region9
    $region8: #{tpu_custom_call.1} parent=1 // pred_region
      _
    $region9: #{tpu_custom_call.1} parent=1 // pred_fallthru
      _
    %v12 = vld [vmem:[%s0] sm:$0xff]
    %v13 = vld [vmem:[%s0 + $0x8] sm:$0xff]
    %v14 = vld [vmem:[%s0 + $0x10] sm:$0xff]
    %v15 = vld [vmem:[%s0 + $0x18] sm:$0xff]
    %v16 = vld [vmem:[%s0 + $0x20] sm:$0xff]
    %v17 = vld [vmem:[%s0 + $0x28] sm:$0xff]
    %v18 = vld [vmem:[%s0 + $0x30] sm:$0xff]
    %v19 = vld [vmem:[%s0 + $0x38] sm:$0xff]
    %v20 = vld [vmem:[%s1] sm:$0xff]
    %v21 = vld [vmem:[%s1 + $0x8] sm:$0xff]
    %v22 = vld [vmem:[%s1 + $0x10] sm:$0xff]
    %v23 = vld [vmem:[%s1 + $0x18] sm:$0xff]
    %v24 = vld [vmem:[%s1 + $0x20] sm:$0xff]
    %v25 = vld [vmem:[%s1 + $0x28] sm:$0xff]
    %vm26 = vcmask 261120
    %v28 = vsel %vm26, %v12, 0
    %v31 = vsel %vm26, %v13, 0
    %v34 = vsel %vm26, %v14, 0
    %v37 = vsel %vm26, %v15, 0
    %v40 = vsel %vm26, %v16, 0
    %v43 = vsel %vm26, %v17, 0
    %v46 = vsel %vm26, %v18, 0
    %v49 = vsel %vm26, %v19, 0
    %v52 = vsel %vm26, %v20, 0
    %v55 = vsel %vm26, %v21, 0
    %v58 = vsel %vm26, %v22, 0
    %v61 = vsel %vm26, %v23, 0
    %v64 = vsel %vm26, %v24, 0
    %v67 = vsel %vm26, %v25, 0
    %69 = vmatprep.subr.mxu0 0.0
    %70 = vmatpush1.xpose.msra.mxu0 %v52
    %71 = vmatprep.subr.mxu0 0.0
    %72 = vmatpush1.xpose.msra.mxu0 %v55
    %73 = vmatprep.subr.mxu0 0.0
    %74 = vmatpush1.xpose.msra.mxu0 %v58
    %75 = vmatprep.subr.mxu0 0.0
    %76 = vmatpush1.xpose.msra.mxu0 %v61
    %77 = vmatprep.subr.mxu0 0.0
    %78 = vmatpush1.xpose.msra.mxu0 %v64
    %79 = vmatprep.subr.mxu0 0.0
    %80 = vmatpush1.xpose.msra.mxu0 %v67
    %81 = vmatprep.subr.mxu0 0.0
    %82 = vmatpush1.xpose.msra.mxu0 0.0
    %83 = vmatprep.subr.mxu0 0.0
    %84 = vmatpush1.xpose.msra.mxu0 0.0
    %85 = vmatprep.subr.mxu0 0.0
    %86 = vmatpush1.xpose.msra.mxu0 0.0
    %87 = vmatprep.subr.mxu0 0.0
    %88 = vmatpush1.xpose.msra.mxu0 0.0
    %89 = vmatprep.subr.mxu0 0.0
    %90 = vmatpush1.xpose.msra.mxu0 0.0
    %91 = vmatprep.subr.mxu0 0.0
    %92 = vmatpush1.xpose.msra.mxu0 0.0
    %93 = vmatprep.subr.mxu0 0.0
    %94 = vmatpush1.xpose.msra.mxu0 0.0
    %95 = vmatprep.subr.mxu0 0.0
    %96 = vmatpush1.xpose.msra.mxu0 0.0
    %97 = vmatprep.subr.mxu0 0.0
    %98 = vmatpush1.xpose.msra.mxu0 0.0
    %99 = vmatprep.subr.mxu0 0.0
    %100 = vmatpush1.xpose.msra.mxu0 0.0
    %101 = vmatprep.subr.mxu0 0.0
    %102 = vmatpush1.xpose.msra.mxu0 0.0
    %103 = vmatprep.subr.mxu0 0.0
    %104 = vmatpush1.xpose.msra.mxu0 0.0
    %105 = vmatprep.subr.mxu0 0.0
    %106 = vmatpush1.xpose.msra.mxu0 0.0
    %107 = vmatprep.subr.mxu0 0.0
    %108 = vmatpush1.xpose.msra.mxu0 0.0
    %109 = vmatprep.subr.mxu0 0.0
    %110 = vmatpush1.xpose.msra.mxu0 0.0
    %111 = vmatprep.subr.mxu0 0.0
    %112 = vmatpush1.xpose.msra.mxu0 0.0
    %113 = vmatprep.subr.mxu0 0.0
    %114 = vmatpush1.xpose.msra.mxu0 0.0
    %115 = vmatprep.subr.mxu0 0.0
    %116 = vmatpush1.xpose.msra.mxu0 0.0
    %117 = vmatprep.subr.mxu0 0.0
    %118 = vmatpush1.xpose.msra.mxu0 0.0
    %119 = vmatprep.subr.mxu0 0.0
    %120 = vmatpush1.xpose.msra.mxu0 0.0
    %121 = vmatprep.subr.mxu0 0.0
    %122 = vmatpush1.xpose.msra.mxu0 0.0
    %123 = vmatprep.subr.mxu0 0.0
    %124 = vmatpush1.xpose.msra.mxu0 0.0
    %125 = vmatprep.subr.mxu0 0.0
    %126 = vmatpush1.xpose.msra.mxu0 0.0
    %127 = vmatprep.subr.mxu0 0.0
    %128 = vmatpush1.xpose.msra.mxu0 0.0
    %129 = vmatprep.subr.mxu0 0.0
    %130 = vmatpush1.xpose.msra.mxu0 0.0
    %131 = vmatprep.subr.mxu0 0.0
    %132 = vmatpush1.xpose.msra.mxu0 0.0
    %133 = vmatprep.mubr.f32.mxu0 0.0
    %134 = vmatmul.mubr.f32.gmra.mrb[0].mxu0 %v28
    %v135 = vpop.f32.mrb[0].mxu0
    %v136 = vadd.f32 0.0, %v135
    %v137 = vpop.f32.mrb[0].mxu0
    %138 = vmatprep.mubr.f32.mxu0 0.0
    %139 = vmatmul.mubr.f32.gmra.mrb[0].mxu0 %v31
    %v140 = vpop.f32.mrb[0].mxu0
    %v141 = vadd.f32 0.0, %v140
    %v142 = vpop.f32.mrb[0].mxu0
    %143 = vmatprep.mubr.f32.mxu0 0.0
    %144 = vmatmul.mubr.f32.gmra.mrb[0].mxu0 %v34
    %v145 = vpop.f32.mrb[0].mxu0
    %v146 = vadd.f32 0.0, %v145
    %v147 = vpop.f32.mrb[0].mxu0
    %148 = vmatprep.mubr.f32.mxu0 0.0
    %149 = vmatmul.mubr.f32.gmra.mrb[0].mxu0 %v37
    %v150 = vpop.f32.mrb[0].mxu0
    %v151 = vadd.f32 0.0, %v150
    %v152 = vpop.f32.mrb[0].mxu0
    %153 = vmatprep.mubr.f32.mxu0 0.0
    %154 = vmatmul.mubr.f32.gmra.mrb[0].mxu0 %v40
    %v155 = vpop.f32.mrb[0].mxu0
    %v156 = vadd.f32 0.0, %v155
    %v157 = vpop.f32.mrb[0].mxu0
    %158 = vmatprep.mubr.f32.mxu0 0.0
    %159 = vmatmul.mubr.f32.gmra.mrb[0].mxu0 %v43
    %v160 = vpop.f32.mrb[0].mxu0
    %v161 = vadd.f32 0.0, %v160
    %v162 = vpop.f32.mrb[0].mxu0
    %163 = vmatprep.mubr.f32.mxu0 0.0
    %164 = vmatmul.mubr.f32.gmra.mrb[0].mxu0 %v46
    %v165 = vpop.f32.mrb[0].mxu0
    %v166 = vadd.f32 0.0, %v165
    %v167 = vpop.f32.mrb[0].mxu0
    %168 = vmatprep.mubr.f32.mxu0 0.0
    %169 = vmatmul.mubr.f32.gmra.mrb[0].mxu0 %v49
    %v170 = vpop.f32.mrb[0].mxu0
    %v171 = vadd.f32 0.0, %v170
    %v172 = vpop.f32.mrb[0].mxu0
    %173 = vdwg.mxu0
    %v174 = vlaneseq
    %v175 = vand.u32 %v174, 127
    %vm176 = vcmask 392192
    %v177 = vsel %vm176, %v136, -inf
    %178 = vmax.index.xlane.f32.xlu0 %v177
    %v179 = vpop.xlane.xlu0 %178
    %v180 = vsel %vm176, %v141, -inf
    %181 = vmax.index.xlane.f32.xlu0 %v180
    %v182 = vpop.xlane.xlu0 %181
    %v183 = vsel %vm176, %v146, -inf
    %184 = vmax.index.xlane.f32.xlu0 %v183
    %v185 = vpop.xlane.xlu0 %184
    %v186 = vsel %vm176, %v151, -inf
    %187 = vmax.index.xlane.f32.xlu0 %v186
    %v188 = vpop.xlane.xlu0 %187
    %v189 = vsel %vm176, %v156, -inf
    %190 = vmax.index.xlane.f32.xlu0 %v189
    %v191 = vpop.xlane.xlu0 %190
    %v192 = vsel %vm176, %v161, -inf
    %193 = vmax.index.xlane.f32.xlu0 %v192
    %v194 = vpop.xlane.xlu0 %193
    %v195 = vsel %vm176, %v166, -inf
    %196 = vmax.index.xlane.f32.xlu0 %v195
    %v197 = vpop.xlane.xlu0 %196
    %v198 = vsel %vm176, %v171, -inf
    %199 = vmax.index.xlane.f32.xlu0 %v198
    %v200 = vpop.xlane.xlu0 %199
    %vm201 = vcmp.eq.s32.totalorder %v175, %v179
    %vm202 = vcmp.eq.s32.totalorder %v175, %v182
    %vm203 = vcmp.eq.s32.totalorder %v175, %v185
    %vm204 = vcmp.eq.s32.totalorder %v175, %v188
    %vm205 = vcmp.eq.s32.totalorder %v175, %v191
    %vm206 = vcmp.eq.s32.totalorder %v175, %v194
    %vm207 = vcmp.eq.s32.totalorder %v175, %v197
    %vm208 = vcmp.eq.s32.totalorder %v175, %v200
    %v209 = vsel %vm201, -1e+30, %v136
    %v210 = vsel %vm202, -1e+30, %v141
    %v211 = vsel %vm203, -1e+30, %v146
    %v212 = vsel %vm204, -1e+30, %v151
    %v213 = vsel %vm205, -1e+30, %v156
    %v214 = vsel %vm206, -1e+30, %v161
    %v215 = vsel %vm207, -1e+30, %v166
    %v216 = vsel %vm208, -1e+30, %v171
    %vm217 = vcmp.eq.s32.totalorder %v175, 0
    %v218 = vsel %vm217, 1, 0
    %vm219 = vcmp.eq.s32.totalorder %v218, 1
    %v220 = vsel %vm219, %v179, 0
    %v221 = vsel %vm219, %v182, 0
    %v222 = vsel %vm219, %v185, 0
    %v223 = vsel %vm219, %v188, 0
    %v224 = vsel %vm219, %v191, 0
    %v225 = vsel %vm219, %v194, 0
    %v226 = vsel %vm219, %v197, 0
    %v227 = vsel %vm219, %v200, 0
    %v228 = vsel %vm176, %v209, -inf
    %229 = vmax.index.xlane.f32.xlu0 %v228
    %v230 = vpop.xlane.xlu0 %229
    %v231 = vsel %vm176, %v210, -inf
    %232 = vmax.index.xlane.f32.xlu0 %v231
    %v233 = vpop.xlane.xlu0 %232
    %v234 = vsel %vm176, %v211, -inf
    %235 = vmax.index.xlane.f32.xlu0 %v234
    %v236 = vpop.xlane.xlu0 %235
    %v237 = vsel %vm176, %v212, -inf
    %238 = vmax.index.xlane.f32.xlu0 %v237
    %v239 = vpop.xlane.xlu0 %238
    %v240 = vsel %vm176, %v213, -inf
    %241 = vmax.index.xlane.f32.xlu0 %v240
    %v242 = vpop.xlane.xlu0 %241
    %v243 = vsel %vm176, %v214, -inf
    %244 = vmax.index.xlane.f32.xlu0 %v243
    %v245 = vpop.xlane.xlu0 %244
    %v246 = vsel %vm176, %v215, -inf
    %247 = vmax.index.xlane.f32.xlu0 %v246
    %v248 = vpop.xlane.xlu0 %247
    %v249 = vsel %vm176, %v216, -inf
    %250 = vmax.index.xlane.f32.xlu0 %v249
    %v251 = vpop.xlane.xlu0 %250
    %vm252 = vcmp.eq.s32.totalorder %v175, %v230
    %vm253 = vcmp.eq.s32.totalorder %v175, %v233
    %vm254 = vcmp.eq.s32.totalorder %v175, %v236
    %vm255 = vcmp.eq.s32.totalorder %v175, %v239
    %vm256 = vcmp.eq.s32.totalorder %v175, %v242
    %vm257 = vcmp.eq.s32.totalorder %v175, %v245
    %vm258 = vcmp.eq.s32.totalorder %v175, %v248
    %vm259 = vcmp.eq.s32.totalorder %v175, %v251
    %v260 = vsel %vm252, -1e+30, %v209
    %v261 = vsel %vm253, -1e+30, %v210
    %v262 = vsel %vm254, -1e+30, %v211
    %v263 = vsel %vm255, -1e+30, %v212
    %v264 = vsel %vm256, -1e+30, %v213
    %v265 = vsel %vm257, -1e+30, %v214
    %v266 = vsel %vm258, -1e+30, %v215
    %v267 = vsel %vm259, -1e+30, %v216
    %vm268 = vcmp.eq.s32.totalorder %v175, 1
    %v269 = vsel %vm268, 1, 0
    %vm270 = vcmp.eq.s32.totalorder %v269, 1
    %v271 = vsel %vm270, %v230, %v220
    %v272 = vsel %vm270, %v233, %v221
    %v273 = vsel %vm270, %v236, %v222
    %v274 = vsel %vm270, %v239, %v223
    %v275 = vsel %vm270, %v242, %v224
    %v276 = vsel %vm270, %v245, %v225
    %v277 = vsel %vm270, %v248, %v226
    %v278 = vsel %vm270, %v251, %v227
    %v279 = vsel %vm176, %v260, -inf
    %280 = vmax.index.xlane.f32.xlu0 %v279
    %v281 = vpop.xlane.xlu0 %280
    %v282 = vsel %vm176, %v261, -inf
    %283 = vmax.index.xlane.f32.xlu0 %v282
    %v284 = vpop.xlane.xlu0 %283
    %v285 = vsel %vm176, %v262, -inf
    %286 = vmax.index.xlane.f32.xlu0 %v285
    %v287 = vpop.xlane.xlu0 %286
    %v288 = vsel %vm176, %v263, -inf
    %289 = vmax.index.xlane.f32.xlu0 %v288
    %v290 = vpop.xlane.xlu0 %289
    %v291 = vsel %vm176, %v264, -inf
    %292 = vmax.index.xlane.f32.xlu0 %v291
    %v293 = vpop.xlane.xlu0 %292
    %v294 = vsel %vm176, %v265, -inf
    %295 = vmax.index.xlane.f32.xlu0 %v294
    %v296 = vpop.xlane.xlu0 %295
    %v297 = vsel %vm176, %v266, -inf
    %298 = vmax.index.xlane.f32.xlu0 %v297
    %v299 = vpop.xlane.xlu0 %298
    %v300 = vsel %vm176, %v267, -inf
    %301 = vmax.index.xlane.f32.xlu0 %v300
    %v302 = vpop.xlane.xlu0 %301
    %vm303 = vcmp.eq.s32.totalorder %v175, 2
    %v304 = vsel %vm303, 1, 0
    %vm305 = vcmp.eq.s32.totalorder %v304, 1
    %v306 = vsel %vm305, %v281, %v271
    %v307 = vsel %vm305, %v284, %v272
    %v308 = vsel %vm305, %v287, %v273
    %v309 = vsel %vm305, %v290, %v274
    %v310 = vsel %vm305, %v293, %v275
    %v311 = vsel %vm305, %v296, %v276
    %v312 = vsel %vm305, %v299, %v277
    %v313 = vsel %vm305, %v302, %v278
    %314 = vst [vmem:[#allocation2] sm:$0xff] %v306
    %315 = vst [vmem:[#allocation2 + $0x8] sm:$0xff] %v307
    %316 = vst [vmem:[#allocation2 + $0x10] sm:$0xff] %v308
    %317 = vst [vmem:[#allocation2 + $0x18] sm:$0xff] %v309
    %318 = vst [vmem:[#allocation2 + $0x20] sm:$0xff] %v310
    %319 = vst [vmem:[#allocation2 + $0x28] sm:$0xff] %v311
    %320 = vst [vmem:[#allocation2 + $0x30] sm:$0xff] %v312
    %321 = vst [vmem:[#allocation2 + $0x38] sm:$0xff] %v313
    // Predicated region
    $region10: #{tpu_custom_call.1} parent=1 // pred_check
      _
    $region11: #{tpu_custom_call.1} parent=1 // pred_check_branch
      %323 = sbr.rel (0) target = $region13
    $region12: #{tpu_custom_call.1} parent=1 // pred_region
      %s325 = ssub.s32 1024, 1024
      %326 = vsyncadd [#allocation3], %s325
      %s327 = sshll.u32 [#allocation2], 4
      %s328 = int_to_ptr.vmem [resolvable:$true] %s327
      %333 = dma.vmem_to_hbm [thread:$0]  %s328, 1024, %s2, [#allocation3], 128, 128, 8
    $region13: #{tpu_custom_call.1} parent=1 // pred_fallthru
      _
    // Predicated region
    $region14: #{tpu_custom_call.1} parent=1 // pred_check
      _
    $region15: #{tpu_custom_call.1} parent=1 // pred_check_branch
      %335 = sbr.rel (0) target = $region17
    $region16: #{tpu_custom_call.1} parent=1 // pred_region
      %336 = dma.done [#allocation3], 1024
    $region17: #{tpu_custom_call.1} parent=1 // pred_fallthru
      _
    %337 = vsyncpa [#allocation3], 1

// kernel: tpu_custom_call.1
$region0: #{tpu_custom_call.1}
  #allocation0 [shape = 'u32[]', space=smem, size = 0x4, offset = 0x4, fixed_abs, tag = 'smem constant byte address 0x4 - core index']
  #allocation1 [shape = 'u32[144,128]{1,0:T(1,128)}', space=vmem, size = 0x12000, scoped, tag = 'internal scratch']
  %s0 = inlined_call_operand.vmem [shape: f32[64,32], index: 0, kind: input, shape index: {}]
  %s1 = inlined_call_operand.vmem [shape: f32[48,32], index: 1, kind: input, shape index: {}]
  %s2 = inlined_call_operand.hbm [shape: s32[64,128], index: 2, kind: output, shape index: {}]
  %s3 = sld [smem:[#allocation0]]
  $region18: #{tpu_custom_call.1} parent=0
    _
  %s5 = ssub.s32 1, %s3
  %s6 = scalar_select 0, %s5, %s3
  $region1: #{tpu_custom_call.1} parent=0
    #allocation2 [shape = 'u8[32768]{0}', space=vmem, size = 0x8000, scoped, tag = 'output window, operand 0, single buffered']
    #allocation3 [shape = 's32[1]{0}', space=sflag, size = 0x4, scoped, tag = 'scoped memory for tpu_custom_call.1']
    %7 = vsyncpa [#allocation3], 0
    // Predicated region
    $region2: #{tpu_custom_call.1} parent=1 // pred_check
      _
    $region3: #{tpu_custom_call.1} parent=1 // pred_check_branch
      %9 = sbr.rel (0) target = $region5
    $region4: #{tpu_custom_call.1} parent=1 // pred_region
      _
    $region5: #{tpu_custom_call.1} parent=1 // pred_fallthru
      _
    // Predicated region
    $region6: #{tpu_custom_call.1} parent=1 // pred_check
      _
    $region7: #{tpu_custom_call.1} parent=1 // pred_check_branch
      %11 = sbr.rel (0) target = $region9
    $region8: #{tpu_custom_call.1} parent=1 // pred_region
      _
    $region9: #{tpu_custom_call.1} parent=1 // pred_fallthru
      _
    %v12 = vld [vmem:[%s0] sm:$0xff]
    %v13 = vld [vmem:[%s0 + $0x8] sm:$0xff]
    %v14 = vld [vmem:[%s0 + $0x10] sm:$0xff]
    %v15 = vld [vmem:[%s0 + $0x18] sm:$0xff]
    %v16 = vld [vmem:[%s0 + $0x20] sm:$0xff]
    %v17 = vld [vmem:[%s0 + $0x28] sm:$0xff]
    %v18 = vld [vmem:[%s0 + $0x30] sm:$0xff]
    %v19 = vld [vmem:[%s0 + $0x38] sm:$0xff]
    %v20 = vld [vmem:[%s1] sm:$0xff]
    %v21 = vld [vmem:[%s1 + $0x8] sm:$0xff]
    %v22 = vld [vmem:[%s1 + $0x10] sm:$0xff]
    %v23 = vld [vmem:[%s1 + $0x18] sm:$0xff]
    %v24 = vld [vmem:[%s1 + $0x20] sm:$0xff]
    %v25 = vld [vmem:[%s1 + $0x28] sm:$0xff]
    %vm26 = vcmask 261120
    %v28 = vsel %vm26, %v12, 0
    %v31 = vsel %vm26, %v13, 0
    %v34 = vsel %vm26, %v14, 0
    %v37 = vsel %vm26, %v15, 0
    %v40 = vsel %vm26, %v16, 0
    %v43 = vsel %vm26, %v17, 0
    %v46 = vsel %vm26, %v18, 0
    %v49 = vsel %vm26, %v19, 0
    %v52 = vsel %vm26, %v20, 0
    %v55 = vsel %vm26, %v21, 0
    %v58 = vsel %vm26, %v22, 0
    %v61 = vsel %vm26, %v23, 0
    %v64 = vsel %vm26, %v24, 0
    %v67 = vsel %vm26, %v25, 0
    %69 = vmatprep.subr.mxu0 0.0
    %70 = vmatpush1.xpose.msra.mxu0 %v52
    %71 = vmatprep.subr.mxu0 0.0
    %72 = vmatpush1.xpose.msra.mxu0 %v55
    %73 = vmatprep.subr.mxu0 0.0
    %74 = vmatpush1.xpose.msra.mxu0 %v58
    %75 = vmatprep.subr.mxu0 0.0
    %76 = vmatpush1.xpose.msra.mxu0 %v61
    %77 = vmatprep.subr.mxu0 0.0
    %78 = vmatpush1.xpose.msra.mxu0 %v64
    %79 = vmatprep.subr.mxu0 0.0
    %80 = vmatpush1.xpose.msra.mxu0 %v67
    %81 = vmatprep.subr.mxu0 0.0
    %82 = vmatpush1.xpose.msra.mxu0 0.0
    %83 = vmatprep.subr.mxu0 0.0
    %84 = vmatpush1.xpose.msra.mxu0 0.0
    %85 = vmatprep.subr.mxu0 0.0
    %86 = vmatpush1.xpose.msra.mxu0 0.0
    %87 = vmatprep.subr.mxu0 0.0
    %88 = vmatpush1.xpose.msra.mxu0 0.0
    %89 = vmatprep.subr.mxu0 0.0
    %90 = vmatpush1.xpose.msra.mxu0 0.0
    %91 = vmatprep.subr.mxu0 0.0
    %92 = vmatpush1.xpose.msra.mxu0 0.0
    %93 = vmatprep.subr.mxu0 0.0
    %94 = vmatpush1.xpose.msra.mxu0 0.0
    %95 = vmatprep.subr.mxu0 0.0
    %96 = vmatpush1.xpose.msra.mxu0 0.0
    %97 = vmatprep.subr.mxu0 0.0
    %98 = vmatpush1.xpose.msra.mxu0 0.0
    %99 = vmatprep.subr.mxu0 0.0
    %100 = vmatpush1.xpose.msra.mxu0 0.0
    %101 = vmatprep.subr.mxu0 0.0
    %102 = vmatpush1.xpose.msra.mxu0 0.0
    %103 = vmatprep.subr.mxu0 0.0
    %104 = vmatpush1.xpose.msra.mxu0 0.0
    %105 = vmatprep.subr.mxu0 0.0
    %106 = vmatpush1.xpose.msra.mxu0 0.0
    %107 = vmatprep.subr.mxu0 0.0
    %108 = vmatpush1.xpose.msra.mxu0 0.0
    %109 = vmatprep.subr.mxu0 0.0
    %110 = vmatpush1.xpose.msra.mxu0 0.0
    %111 = vmatprep.subr.mxu0 0.0
    %112 = vmatpush1.xpose.msra.mxu0 0.0
    %113 = vmatprep.subr.mxu0 0.0
    %114 = vmatpush1.xpose.msra.mxu0 0.0
    %115 = vmatprep.subr.mxu0 0.0
    %116 = vmatpush1.xpose.msra.mxu0 0.0
    %117 = vmatprep.subr.mxu0 0.0
    %118 = vmatpush1.xpose.msra.mxu0 0.0
    %119 = vmatprep.subr.mxu0 0.0
    %120 = vmatpush1.xpose.msra.mxu0 0.0
    %121 = vmatprep.subr.mxu0 0.0
    %122 = vmatpush1.xpose.msra.mxu0 0.0
    %123 = vmatprep.subr.mxu0 0.0
    %124 = vmatpush1.xpose.msra.mxu0 0.0
    %125 = vmatprep.subr.mxu0 0.0
    %126 = vmatpush1.xpose.msra.mxu0 0.0
    %127 = vmatprep.subr.mxu0 0.0
    %128 = vmatpush1.xpose.msra.mxu0 0.0
    %129 = vmatprep.subr.mxu0 0.0
    %130 = vmatpush1.xpose.msra.mxu0 0.0
    %131 = vmatprep.subr.mxu0 0.0
    %132 = vmatpush1.xpose.msra.mxu0 0.0
    %133 = vmatprep.mubr.f32.mxu0 0.0
    %134 = vmatmul.mubr.f32.gmra.mrb[0].mxu0 %v28
    %v135 = vpop.f32.mrb[0].mxu0
    %v136 = vadd.f32 0.0, %v135
    %v137 = vpop.f32.mrb[0].mxu0
    %138 = vmatprep.mubr.f32.mxu0 0.0
    %139 = vmatmul.mubr.f32.gmra.mrb[0].mxu0 %v31
    %v140 = vpop.f32.mrb[0].mxu0
    %v141 = vadd.f32 0.0, %v140
    %v142 = vpop.f32.mrb[0].mxu0
    %143 = vmatprep.mubr.f32.mxu0 0.0
    %144 = vmatmul.mubr.f32.gmra.mrb[0].mxu0 %v34
    %v145 = vpop.f32.mrb[0].mxu0
    %v146 = vadd.f32 0.0, %v145
    %v147 = vpop.f32.mrb[0].mxu0
    %148 = vmatprep.mubr.f32.mxu0 0.0
    %149 = vmatmul.mubr.f32.gmra.mrb[0].mxu0 %v37
    %v150 = vpop.f32.mrb[0].mxu0
    %v151 = vadd.f32 0.0, %v150
    %v152 = vpop.f32.mrb[0].mxu0
    %153 = vmatprep.mubr.f32.mxu0 0.0
    %154 = vmatmul.mubr.f32.gmra.mrb[0].mxu0 %v40
    %v155 = vpop.f32.mrb[0].mxu0
    %v156 = vadd.f32 0.0, %v155
    %v157 = vpop.f32.mrb[0].mxu0
    %158 = vmatprep.mubr.f32.mxu0 0.0
    %159 = vmatmul.mubr.f32.gmra.mrb[0].mxu0 %v43
    %v160 = vpop.f32.mrb[0].mxu0
    %v161 = vadd.f32 0.0, %v160
    %v162 = vpop.f32.mrb[0].mxu0
    %163 = vmatprep.mubr.f32.mxu0 0.0
    %164 = vmatmul.mubr.f32.gmra.mrb[0].mxu0 %v46
    %v165 = vpop.f32.mrb[0].mxu0
    %v166 = vadd.f32 0.0, %v165
    %v167 = vpop.f32.mrb[0].mxu0
    %168 = vmatprep.mubr.f32.mxu0 0.0
    %169 = vmatmul.mubr.f32.gmra.mrb[0].mxu0 %v49
    %v170 = vpop.f32.mrb[0].mxu0
    %v171 = vadd.f32 0.0, %v170
    %v172 = vpop.f32.mrb[0].mxu0
    %173 = vdwg.mxu0
    %v174 = vlaneseq
    %v175 = vand.u32 %v174, 127
    %vm176 = vcmask 392192
    %v177 = vsel %vm176, %v136, -inf
    %178 = vmax.xlane.f32.xlu0 %v177
    %v179 = vpop.xlane.xlu0 %178
    %v180 = vsel %vm176, %v141, -inf
    %181 = vmax.xlane.f32.xlu0 %v180
    %v182 = vpop.xlane.xlu0 %181
    %v183 = vsel %vm176, %v146, -inf
    %184 = vmax.xlane.f32.xlu0 %v183
    %v185 = vpop.xlane.xlu0 %184
    %v186 = vsel %vm176, %v151, -inf
    %187 = vmax.xlane.f32.xlu0 %v186
    %v188 = vpop.xlane.xlu0 %187
    %v189 = vsel %vm176, %v156, -inf
    %190 = vmax.xlane.f32.xlu0 %v189
    %v191 = vpop.xlane.xlu0 %190
    %v192 = vsel %vm176, %v161, -inf
    %193 = vmax.xlane.f32.xlu0 %v192
    %v194 = vpop.xlane.xlu0 %193
    %v195 = vsel %vm176, %v166, -inf
    %196 = vmax.xlane.f32.xlu0 %v195
    %v197 = vpop.xlane.xlu0 %196
    %v198 = vsel %vm176, %v171, -inf
    %199 = vmax.xlane.f32.xlu0 %v198
    %v200 = vpop.xlane.xlu0 %199
    %vm201 = vcmp.eq.f32.partialorder %v136, %v179
    %vm202 = vcmp.eq.f32.partialorder %v141, %v182
    %vm203 = vcmp.eq.f32.partialorder %v146, %v185
    %vm204 = vcmp.eq.f32.partialorder %v151, %v188
    %vm205 = vcmp.eq.f32.partialorder %v156, %v191
    %vm206 = vcmp.eq.f32.partialorder %v161, %v194
    %vm207 = vcmp.eq.f32.partialorder %v166, %v197
    %vm208 = vcmp.eq.f32.partialorder %v171, %v200
    %v209 = vsel %vm201, %v175, 48
    %v210 = vsel %vm202, %v175, 48
    %v211 = vsel %vm203, %v175, 48
    %v212 = vsel %vm204, %v175, 48
    %v213 = vsel %vm205, %v175, 48
    %v214 = vsel %vm206, %v175, 48
    %v215 = vsel %vm207, %v175, 48
    %v216 = vsel %vm208, %v175, 48
    %v217 = vsel %vm176, %v209, 2147483647
    %v218 = vand.u32 %v217, 65535
    %v219 = vshra.s32 %v217, 16
    %v220 = vcvt.s32.f32 %v218
    %v221 = vcvt.s32.f32 %v219
    %222 = vmin.xlane.f32.xlu0 %v221
    %v223 = vpop.xlane.xlu0 %222
    %vm224 = vcmp.eq.f32.partialorder %v221, %v223
    %v225 = vsel %vm224, %v220, inf
    %226 = vmin.xlane.f32.xlu0 %v225
    %v227 = vpop.xlane.xlu0 %226
    %v228 = vcvt.f32.s32 %v227
    %v229 = vcvt.f32.s32 %v223
    %v230 = vshll.u32 %v229, 16
    %v231 = vadd.s32 %v230, %v228
    %v232 = vsel %vm176, %v210, 2147483647
    %v233 = vand.u32 %v232, 65535
    %v234 = vshra.s32 %v232, 16
    %v235 = vcvt.s32.f32 %v233
    %v236 = vcvt.s32.f32 %v234
    %237 = vmin.xlane.f32.xlu0 %v236
    %v238 = vpop.xlane.xlu0 %237
    %vm239 = vcmp.eq.f32.partialorder %v236, %v238
    %v240 = vsel %vm239, %v235, inf
    %241 = vmin.xlane.f32.xlu0 %v240
    %v242 = vpop.xlane.xlu0 %241
    %v243 = vcvt.f32.s32 %v242
    %v244 = vcvt.f32.s32 %v238
    %v245 = vshll.u32 %v244, 16
    %v246 = vadd.s32 %v245, %v243
    %v247 = vsel %vm176, %v211, 2147483647
    %v248 = vand.u32 %v247, 65535
    %v249 = vshra.s32 %v247, 16
    %v250 = vcvt.s32.f32 %v248
    %v251 = vcvt.s32.f32 %v249
    %252 = vmin.xlane.f32.xlu0 %v251
    %v253 = vpop.xlane.xlu0 %252
    %vm254 = vcmp.eq.f32.partialorder %v251, %v253
    %v255 = vsel %vm254, %v250, inf
    %256 = vmin.xlane.f32.xlu0 %v255
    %v257 = vpop.xlane.xlu0 %256
    %v258 = vcvt.f32.s32 %v257
    %v259 = vcvt.f32.s32 %v253
    %v260 = vshll.u32 %v259, 16
    %v261 = vadd.s32 %v260, %v258
    %v262 = vsel %vm176, %v212, 2147483647
    %v263 = vand.u32 %v262, 65535
    %v264 = vshra.s32 %v262, 16
    %v265 = vcvt.s32.f32 %v263
    %v266 = vcvt.s32.f32 %v264
    %267 = vmin.xlane.f32.xlu0 %v266
    %v268 = vpop.xlane.xlu0 %267
    %vm269 = vcmp.eq.f32.partialorder %v266, %v268
    %v270 = vsel %vm269, %v265, inf
    %271 = vmin.xlane.f32.xlu0 %v270
    %v272 = vpop.xlane.xlu0 %271
    %v273 = vcvt.f32.s32 %v272
    %v274 = vcvt.f32.s32 %v268
    %v275 = vshll.u32 %v274, 16
    %v276 = vadd.s32 %v275, %v273
    %v277 = vsel %vm176, %v213, 2147483647
    %v278 = vand.u32 %v277, 65535
    %v279 = vshra.s32 %v277, 16
    %v280 = vcvt.s32.f32 %v278
    %v281 = vcvt.s32.f32 %v279
    %282 = vmin.xlane.f32.xlu0 %v281
    %v283 = vpop.xlane.xlu0 %282
    %vm284 = vcmp.eq.f32.partialorder %v281, %v283
    %v285 = vsel %vm284, %v280, inf
    %286 = vmin.xlane.f32.xlu0 %v285
    %v287 = vpop.xlane.xlu0 %286
    %v288 = vcvt.f32.s32 %v287
    %v289 = vcvt.f32.s32 %v283
    %v290 = vshll.u32 %v289, 16
    %v291 = vadd.s32 %v290, %v288
    %v292 = vsel %vm176, %v214, 2147483647
    %v293 = vand.u32 %v292, 65535
    %v294 = vshra.s32 %v292, 16
    %v295 = vcvt.s32.f32 %v293
    %v296 = vcvt.s32.f32 %v294
    %297 = vmin.xlane.f32.xlu0 %v296
    %v298 = vpop.xlane.xlu0 %297
    %vm299 = vcmp.eq.f32.partialorder %v296, %v298
    %v300 = vsel %vm299, %v295, inf
    %301 = vmin.xlane.f32.xlu0 %v300
    %v302 = vpop.xlane.xlu0 %301
    %v303 = vcvt.f32.s32 %v302
    %v304 = vcvt.f32.s32 %v298
    %v305 = vshll.u32 %v304, 16
    %v306 = vadd.s32 %v305, %v303
    %v307 = vsel %vm176, %v215, 2147483647
    %v308 = vand.u32 %v307, 65535
    %v309 = vshra.s32 %v307, 16
    %v310 = vcvt.s32.f32 %v308
    %v311 = vcvt.s32.f32 %v309
    %312 = vmin.xlane.f32.xlu0 %v311
    %v313 = vpop.xlane.xlu0 %312
    %vm314 = vcmp.eq.f32.partialorder %v311, %v313
    %v315 = vsel %vm314, %v310, inf
    %316 = vmin.xlane.f32.xlu0 %v315
    %v317 = vpop.xlane.xlu0 %316
    %v318 = vcvt.f32.s32 %v317
    %v319 = vcvt.f32.s32 %v313
    %v320 = vshll.u32 %v319, 16
    %v321 = vadd.s32 %v320, %v318
    %v322 = vsel %vm176, %v216, 2147483647
    %v323 = vand.u32 %v322, 65535
    %v324 = vshra.s32 %v322, 16
    %v325 = vcvt.s32.f32 %v323
    %v326 = vcvt.s32.f32 %v324
    %327 = vmin.xlane.f32.xlu0 %v326
    %v328 = vpop.xlane.xlu0 %327
    %vm329 = vcmp.eq.f32.partialorder %v326, %v328
    %v330 = vsel %vm329, %v325, inf
    %331 = vmin.xlane.f32.xlu0 %v330
    %v332 = vpop.xlane.xlu0 %331
    %v333 = vcvt.f32.s32 %v332
    %v334 = vcvt.f32.s32 %v328
    %v335 = vshll.u32 %v334, 16
    %v336 = vadd.s32 %v335, %v333
    %vm337 = vcmp.eq.s32.totalorder %v175, %v231
    %vm338 = vcmp.eq.s32.totalorder %v175, %v246
    %vm339 = vcmp.eq.s32.totalorder %v175, %v261
    %vm340 = vcmp.eq.s32.totalorder %v175, %v276
    %vm341 = vcmp.eq.s32.totalorder %v175, %v291
    %vm342 = vcmp.eq.s32.totalorder %v175, %v306
    %vm343 = vcmp.eq.s32.totalorder %v175, %v321
    %vm344 = vcmp.eq.s32.totalorder %v175, %v336
    %v345 = vsel %vm337, -1e+30, %v136
    %v346 = vsel %vm338, -1e+30, %v141
    %v347 = vsel %vm339, -1e+30, %v146
    %v348 = vsel %vm340, -1e+30, %v151
    %v349 = vsel %vm341, -1e+30, %v156
    %v350 = vsel %vm342, -1e+30, %v161
    %v351 = vsel %vm343, -1e+30, %v166
    %v352 = vsel %vm344, -1e+30, %v171
    %vm353 = vcmp.eq.s32.totalorder %v175, 0
    %v354 = vsel %vm353, 1, 0
    %vm355 = vcmp.eq.s32.totalorder %v354, 1
    %v356 = vsel %vm355, %v231, 0
    %v357 = vsel %vm355, %v246, 0
    %v358 = vsel %vm355, %v261, 0
    %v359 = vsel %vm355, %v276, 0
    %v360 = vsel %vm355, %v291, 0
    %v361 = vsel %vm355, %v306, 0
    %v362 = vsel %vm355, %v321, 0
    %v363 = vsel %vm355, %v336, 0
    %v364 = vsel %vm176, %v345, -inf
    %365 = vmax.xlane.f32.xlu0 %v364
    %v366 = vpop.xlane.xlu0 %365
    %v367 = vsel %vm176, %v346, -inf
    %368 = vmax.xlane.f32.xlu0 %v367
    %v369 = vpop.xlane.xlu0 %368
    %v370 = vsel %vm176, %v347, -inf
    %371 = vmax.xlane.f32.xlu0 %v370
    %v372 = vpop.xlane.xlu0 %371
    %v373 = vsel %vm176, %v348, -inf
    %374 = vmax.xlane.f32.xlu0 %v373
    %v375 = vpop.xlane.xlu0 %374
    %v376 = vsel %vm176, %v349, -inf
    %377 = vmax.xlane.f32.xlu0 %v376
    %v378 = vpop.xlane.xlu0 %377
    %v379 = vsel %vm176, %v350, -inf
    %380 = vmax.xlane.f32.xlu0 %v379
    %v381 = vpop.xlane.xlu0 %380
    %v382 = vsel %vm176, %v351, -inf
    %383 = vmax.xlane.f32.xlu0 %v382
    %v384 = vpop.xlane.xlu0 %383
    %v385 = vsel %vm176, %v352, -inf
    %386 = vmax.xlane.f32.xlu0 %v385
    %v387 = vpop.xlane.xlu0 %386
    %vm388 = vcmp.eq.f32.partialorder %v345, %v366
    %vm389 = vcmp.eq.f32.partialorder %v346, %v369
    %vm390 = vcmp.eq.f32.partialorder %v347, %v372
    %vm391 = vcmp.eq.f32.partialorder %v348, %v375
    %vm392 = vcmp.eq.f32.partialorder %v349, %v378
    %vm393 = vcmp.eq.f32.partialorder %v350, %v381
    %vm394 = vcmp.eq.f32.partialorder %v351, %v384
    %vm395 = vcmp.eq.f32.partialorder %v352, %v387
    %v396 = vsel %vm388, %v175, 48
    %v397 = vsel %vm389, %v175, 48
    %v398 = vsel %vm390, %v175, 48
    %v399 = vsel %vm391, %v175, 48
    %v400 = vsel %vm392, %v175, 48
    %v401 = vsel %vm393, %v175, 48
    %v402 = vsel %vm394, %v175, 48
    %v403 = vsel %vm395, %v175, 48
    %v404 = vsel %vm176, %v396, 2147483647
    %v405 = vand.u32 %v404, 65535
    %v406 = vshra.s32 %v404, 16
    %v407 = vcvt.s32.f32 %v405
    %v408 = vcvt.s32.f32 %v406
    %409 = vmin.xlane.f32.xlu0 %v408
    %v410 = vpop.xlane.xlu0 %409
    %vm411 = vcmp.eq.f32.partialorder %v408, %v410
    %v412 = vsel %vm411, %v407, inf
    %413 = vmin.xlane.f32.xlu0 %v412
    %v414 = vpop.xlane.xlu0 %413
    %v415 = vcvt.f32.s32 %v414
    %v416 = vcvt.f32.s32 %v410
    %v417 = vshll.u32 %v416, 16
    %v418 = vadd.s32 %v417, %v415
    %v419 = vsel %vm176, %v397, 2147483647
    %v420 = vand.u32 %v419, 65535
    %v421 = vshra.s32 %v419, 16
    %v422 = vcvt.s32.f32 %v420
    %v423 = vcvt.s32.f32 %v421
    %424 = vmin.xlane.f32.xlu0 %v423
    %v425 = vpop.xlane.xlu0 %424
    %vm426 = vcmp.eq.f32.partialorder %v423, %v425
    %v427 = vsel %vm426, %v422, inf
    %428 = vmin.xlane.f32.xlu0 %v427
    %v429 = vpop.xlane.xlu0 %428
    %v430 = vcvt.f32.s32 %v429
    %v431 = vcvt.f32.s32 %v425
    %v432 = vshll.u32 %v431, 16
    %v433 = vadd.s32 %v432, %v430
    %v434 = vsel %vm176, %v398, 2147483647
    %v435 = vand.u32 %v434, 65535
    %v436 = vshra.s32 %v434, 16
    %v437 = vcvt.s32.f32 %v435
    %v438 = vcvt.s32.f32 %v436
    %439 = vmin.xlane.f32.xlu0 %v438
    %v440 = vpop.xlane.xlu0 %439
    %vm441 = vcmp.eq.f32.partialorder %v438, %v440
    %v442 = vsel %vm441, %v437, inf
    %443 = vmin.xlane.f32.xlu0 %v442
    %v444 = vpop.xlane.xlu0 %443
    %v445 = vcvt.f32.s32 %v444
    %v446 = vcvt.f32.s32 %v440
    %v447 = vshll.u32 %v446, 16
    %v448 = vadd.s32 %v447, %v445
    %v449 = vsel %vm176, %v399, 2147483647
    %v450 = vand.u32 %v449, 65535
    %v451 = vshra.s32 %v449, 16
    %v452 = vcvt.s32.f32 %v450
    %v453 = vcvt.s32.f32 %v451
    %454 = vmin.xlane.f32.xlu0 %v453
    %v455 = vpop.xlane.xlu0 %454
    %vm456 = vcmp.eq.f32.partialorder %v453, %v455
    %v457 = vsel %vm456, %v452, inf
    %458 = vmin.xlane.f32.xlu0 %v457
    %v459 = vpop.xlane.xlu0 %458
    %v460 = vcvt.f32.s32 %v459
    %v461 = vcvt.f32.s32 %v455
    %v462 = vshll.u32 %v461, 16
    %v463 = vadd.s32 %v462, %v460
    %v464 = vsel %vm176, %v400, 2147483647
    %v465 = vand.u32 %v464, 65535
    %v466 = vshra.s32 %v464, 16
    %v467 = vcvt.s32.f32 %v465
    %v468 = vcvt.s32.f32 %v466
    %469 = vmin.xlane.f32.xlu0 %v468
    %v470 = vpop.xlane.xlu0 %469
    %vm471 = vcmp.eq.f32.partialorder %v468, %v470
    %v472 = vsel %vm471, %v467, inf
    %473 = vmin.xlane.f32.xlu0 %v472
    %v474 = vpop.xlane.xlu0 %473
    %v475 = vcvt.f32.s32 %v474
    %v476 = vcvt.f32.s32 %v470
    %v477 = vshll.u32 %v476, 16
    %v478 = vadd.s32 %v477, %v475
    %v479 = vsel %vm176, %v401, 2147483647
    %v480 = vand.u32 %v479, 65535
    %v481 = vshra.s32 %v479, 16
    %v482 = vcvt.s32.f32 %v480
    %v483 = vcvt.s32.f32 %v481
    %484 = vmin.xlane.f32.xlu0 %v483
    %v485 = vpop.xlane.xlu0 %484
    %vm486 = vcmp.eq.f32.partialorder %v483, %v485
    %v487 = vsel %vm486, %v482, inf
    %488 = vmin.xlane.f32.xlu0 %v487
    %v489 = vpop.xlane.xlu0 %488
    %v490 = vcvt.f32.s32 %v489
    %v491 = vcvt.f32.s32 %v485
    %v492 = vshll.u32 %v491, 16
    %v493 = vadd.s32 %v492, %v490
    %v494 = vsel %vm176, %v402, 2147483647
    %v495 = vand.u32 %v494, 65535
    %v496 = vshra.s32 %v494, 16
    %v497 = vcvt.s32.f32 %v495
    %v498 = vcvt.s32.f32 %v496
    %499 = vmin.xlane.f32.xlu0 %v498
    %v500 = vpop.xlane.xlu0 %499
    %vm501 = vcmp.eq.f32.partialorder %v498, %v500
    %v502 = vsel %vm501, %v497, inf
    %503 = vmin.xlane.f32.xlu0 %v502
    %v504 = vpop.xlane.xlu0 %503
    %v505 = vcvt.f32.s32 %v504
    %v506 = vcvt.f32.s32 %v500
    %v507 = vshll.u32 %v506, 16
    %v508 = vadd.s32 %v507, %v505
    %v509 = vsel %vm176, %v403, 2147483647
    %v510 = vand.u32 %v509, 65535
    %v511 = vshra.s32 %v509, 16
    %v512 = vcvt.s32.f32 %v510
    %v513 = vcvt.s32.f32 %v511
    %514 = vmin.xlane.f32.xlu0 %v513
    %v515 = vpop.xlane.xlu0 %514
    %vm516 = vcmp.eq.f32.partialorder %v513, %v515
    %v517 = vsel %vm516, %v512, inf
    %518 = vmin.xlane.f32.xlu0 %v517
    %v519 = vpop.xlane.xlu0 %518
    %v520 = vcvt.f32.s32 %v519
    %v521 = vcvt.f32.s32 %v515
    %v522 = vshll.u32 %v521, 16
    %v523 = vadd.s32 %v522, %v520
    %vm524 = vcmp.eq.s32.totalorder %v175, %v418
    %vm525 = vcmp.eq.s32.totalorder %v175, %v433
    %vm526 = vcmp.eq.s32.totalorder %v175, %v448
    %vm527 = vcmp.eq.s32.totalorder %v175, %v463
    %vm528 = vcmp.eq.s32.totalorder %v175, %v478
    %vm529 = vcmp.eq.s32.totalorder %v175, %v493
    %vm530 = vcmp.eq.s32.totalorder %v175, %v508
    %vm531 = vcmp.eq.s32.totalorder %v175, %v523
    %v532 = vsel %vm524, -1e+30, %v345
    %v533 = vsel %vm525, -1e+30, %v346
    %v534 = vsel %vm526, -1e+30, %v347
    %v535 = vsel %vm527, -1e+30, %v348
    %v536 = vsel %vm528, -1e+30, %v349
    %v537 = vsel %vm529, -1e+30, %v350
    %v538 = vsel %vm530, -1e+30, %v351
    %v539 = vsel %vm531, -1e+30, %v352
    %vm540 = vcmp.eq.s32.totalorder %v175, 1
    %v541 = vsel %vm540, 1, 0
    %vm542 = vcmp.eq.s32.totalorder %v541, 1
    %v543 = vsel %vm542, %v418, %v356
    %v544 = vsel %vm542, %v433, %v357
    %v545 = vsel %vm542, %v448, %v358
    %v546 = vsel %vm542, %v463, %v359
    %v547 = vsel %vm542, %v478, %v360
    %v548 = vsel %vm542, %v493, %v361
    %v549 = vsel %vm542, %v508, %v362
    %v550 = vsel %vm542, %v523, %v363
    %v551 = vsel %vm176, %v532, -inf
    %552 = vmax.xlane.f32.xlu0 %v551
    %v553 = vpop.xlane.xlu0 %552
    %v554 = vsel %vm176, %v533, -inf
    %555 = vmax.xlane.f32.xlu0 %v554
    %v556 = vpop.xlane.xlu0 %555
    %v557 = vsel %vm176, %v534, -inf
    %558 = vmax.xlane.f32.xlu0 %v557
    %v559 = vpop.xlane.xlu0 %558
    %v560 = vsel %vm176, %v535, -inf
    %561 = vmax.xlane.f32.xlu0 %v560
    %v562 = vpop.xlane.xlu0 %561
    %v563 = vsel %vm176, %v536, -inf
    %564 = vmax.xlane.f32.xlu0 %v563
    %v565 = vpop.xlane.xlu0 %564
    %v566 = vsel %vm176, %v537, -inf
    %567 = vmax.xlane.f32.xlu0 %v566
    %v568 = vpop.xlane.xlu0 %567
    %v569 = vsel %vm176, %v538, -inf
    %570 = vmax.xlane.f32.xlu0 %v569
    %v571 = vpop.xlane.xlu0 %570
    %v572 = vsel %vm176, %v539, -inf
    %573 = vmax.xlane.f32.xlu0 %v572
    %v574 = vpop.xlane.xlu0 %573
    %vm575 = vcmp.eq.f32.partialorder %v532, %v553
    %vm576 = vcmp.eq.f32.partialorder %v533, %v556
    %vm577 = vcmp.eq.f32.partialorder %v534, %v559
    %vm578 = vcmp.eq.f32.partialorder %v535, %v562
    %vm579 = vcmp.eq.f32.partialorder %v536, %v565
    %vm580 = vcmp.eq.f32.partialorder %v537, %v568
    %vm581 = vcmp.eq.f32.partialorder %v538, %v571
    %vm582 = vcmp.eq.f32.partialorder %v539, %v574
    %v583 = vsel %vm575, %v175, 48
    %v584 = vsel %vm576, %v175, 48
    %v585 = vsel %vm577, %v175, 48
    %v586 = vsel %vm578, %v175, 48
    %v587 = vsel %vm579, %v175, 48
    %v588 = vsel %vm580, %v175, 48
    %v589 = vsel %vm581, %v175, 48
    %v590 = vsel %vm582, %v175, 48
    %v591 = vsel %vm176, %v583, 2147483647
    %v592 = vand.u32 %v591, 65535
    %v593 = vshra.s32 %v591, 16
    %v594 = vcvt.s32.f32 %v592
    %v595 = vcvt.s32.f32 %v593
    %596 = vmin.xlane.f32.xlu0 %v595
    %v597 = vpop.xlane.xlu0 %596
    %vm598 = vcmp.eq.f32.partialorder %v595, %v597
    %v599 = vsel %vm598, %v594, inf
    %600 = vmin.xlane.f32.xlu0 %v599
    %v601 = vpop.xlane.xlu0 %600
    %v602 = vcvt.f32.s32 %v601
    %v603 = vcvt.f32.s32 %v597
    %v604 = vshll.u32 %v603, 16
    %v605 = vadd.s32 %v604, %v602
    %v606 = vsel %vm176, %v584, 2147483647
    %v607 = vand.u32 %v606, 65535
    %v608 = vshra.s32 %v606, 16
    %v609 = vcvt.s32.f32 %v607
    %v610 = vcvt.s32.f32 %v608
    %611 = vmin.xlane.f32.xlu0 %v610
    %v612 = vpop.xlane.xlu0 %611
    %vm613 = vcmp.eq.f32.partialorder %v610, %v612
    %v614 = vsel %vm613, %v609, inf
    %615 = vmin.xlane.f32.xlu0 %v614
    %v616 = vpop.xlane.xlu0 %615
    %v617 = vcvt.f32.s32 %v616
    %v618 = vcvt.f32.s32 %v612
    %v619 = vshll.u32 %v618, 16
    %v620 = vadd.s32 %v619, %v617
    %v621 = vsel %vm176, %v585, 2147483647
    %v622 = vand.u32 %v621, 65535
    %v623 = vshra.s32 %v621, 16
    %v624 = vcvt.s32.f32 %v622
    %v625 = vcvt.s32.f32 %v623
    %626 = vmin.xlane.f32.xlu0 %v625
    %v627 = vpop.xlane.xlu0 %626
    %vm628 = vcmp.eq.f32.partialorder %v625, %v627
    %v629 = vsel %vm628, %v624, inf
    %630 = vmin.xlane.f32.xlu0 %v629
    %v631 = vpop.xlane.xlu0 %630
    %v632 = vcvt.f32.s32 %v631
    %v633 = vcvt.f32.s32 %v627
    %v634 = vshll.u32 %v633, 16
    %v635 = vadd.s32 %v634, %v632
    %v636 = vsel %vm176, %v586, 2147483647
    %v637 = vand.u32 %v636, 65535
    %v638 = vshra.s32 %v636, 16
    %v639 = vcvt.s32.f32 %v637
    %v640 = vcvt.s32.f32 %v638
    %641 = vmin.xlane.f32.xlu0 %v640
    %v642 = vpop.xlane.xlu0 %641
    %vm643 = vcmp.eq.f32.partialorder %v640, %v642
    %v644 = vsel %vm643, %v639, inf
    %645 = vmin.xlane.f32.xlu0 %v644
    %v646 = vpop.xlane.xlu0 %645
    %v647 = vcvt.f32.s32 %v646
    %v648 = vcvt.f32.s32 %v642
    %v649 = vshll.u32 %v648, 16
    %v650 = vadd.s32 %v649, %v647
    %v651 = vsel %vm176, %v587, 2147483647
    %v652 = vand.u32 %v651, 65535
    %v653 = vshra.s32 %v651, 16
    %v654 = vcvt.s32.f32 %v652
    %v655 = vcvt.s32.f32 %v653
    %656 = vmin.xlane.f32.xlu0 %v655
    %v657 = vpop.xlane.xlu0 %656
    %vm658 = vcmp.eq.f32.partialorder %v655, %v657
    %v659 = vsel %vm658, %v654, inf
    %660 = vmin.xlane.f32.xlu0 %v659
    %v661 = vpop.xlane.xlu0 %660
    %v662 = vcvt.f32.s32 %v661
    %v663 = vcvt.f32.s32 %v657
    %v664 = vshll.u32 %v663, 16
    %v665 = vadd.s32 %v664, %v662
    %v666 = vsel %vm176, %v588, 2147483647
    %v667 = vand.u32 %v666, 65535
    %v668 = vshra.s32 %v666, 16
    %v669 = vcvt.s32.f32 %v667
    %v670 = vcvt.s32.f32 %v668
    %671 = vmin.xlane.f32.xlu0 %v670
    %v672 = vpop.xlane.xlu0 %671
    %vm673 = vcmp.eq.f32.partialorder %v670, %v672
    %v674 = vsel %vm673, %v669, inf
    %675 = vmin.xlane.f32.xlu0 %v674
    %v676 = vpop.xlane.xlu0 %675
    %v677 = vcvt.f32.s32 %v676
    %v678 = vcvt.f32.s32 %v672
    %v679 = vshll.u32 %v678, 16
    %v680 = vadd.s32 %v679, %v677
    %v681 = vsel %vm176, %v589, 2147483647
    %v682 = vand.u32 %v681, 65535
    %v683 = vshra.s32 %v681, 16
    %v684 = vcvt.s32.f32 %v682
    %v685 = vcvt.s32.f32 %v683
    %686 = vmin.xlane.f32.xlu0 %v685
    %v687 = vpop.xlane.xlu0 %686
    %vm688 = vcmp.eq.f32.partialorder %v685, %v687
    %v689 = vsel %vm688, %v684, inf
    %690 = vmin.xlane.f32.xlu0 %v689
    %v691 = vpop.xlane.xlu0 %690
    %v692 = vcvt.f32.s32 %v691
    %v693 = vcvt.f32.s32 %v687
    %v694 = vshll.u32 %v693, 16
    %v695 = vadd.s32 %v694, %v692
    %v696 = vsel %vm176, %v590, 2147483647
    %v697 = vand.u32 %v696, 65535
    %v698 = vshra.s32 %v696, 16
    %v699 = vcvt.s32.f32 %v697
    %v700 = vcvt.s32.f32 %v698
    %701 = vmin.xlane.f32.xlu0 %v700
    %v702 = vpop.xlane.xlu0 %701
    %vm703 = vcmp.eq.f32.partialorder %v700, %v702
    %v704 = vsel %vm703, %v699, inf
    %705 = vmin.xlane.f32.xlu0 %v704
    %v706 = vpop.xlane.xlu0 %705
    %v707 = vcvt.f32.s32 %v706
    %v708 = vcvt.f32.s32 %v702
    %v709 = vshll.u32 %v708, 16
    %v710 = vadd.s32 %v709, %v707
    %vm711 = vcmp.eq.s32.totalorder %v175, 2
    %v712 = vsel %vm711, 1, 0
    %vm713 = vcmp.eq.s32.totalorder %v712, 1
    %v714 = vsel %vm713, %v605, %v543
    %v715 = vsel %vm713, %v620, %v544
    %v716 = vsel %vm713, %v635, %v545
    %v717 = vsel %vm713, %v650, %v546
    %v718 = vsel %vm713, %v665, %v547
    %v719 = vsel %vm713, %v680, %v548
    %v720 = vsel %vm713, %v695, %v549
    %v721 = vsel %vm713, %v710, %v550
    %722 = vst [vmem:[#allocation2] sm:$0xff] %v714
    %723 = vst [vmem:[#allocation2 + $0x8] sm:$0xff] %v715
    %724 = vst [vmem:[#allocation2 + $0x10] sm:$0xff] %v716
    %725 = vst [vmem:[#allocation2 + $0x18] sm:$0xff] %v717
    %726 = vst [vmem:[#allocation2 + $0x20] sm:$0xff] %v718
    %727 = vst [vmem:[#allocation2 + $0x28] sm:$0xff] %v719
    %728 = vst [vmem:[#allocation2 + $0x30] sm:$0xff] %v720
    %729 = vst [vmem:[#allocation2 + $0x38] sm:$0xff] %v721
    // Predicated region
    $region10: #{tpu_custom_call.1} parent=1 // pred_check
      _
    $region11: #{tpu_custom_call.1} parent=1 // pred_check_branch
      %731 = sbr.rel (0) target = $region13
    $region12: #{tpu_custom_call.1} parent=1 // pred_region
      %s733 = ssub.s32 1024, 1024
      %734 = vsyncadd [#allocation3], %s733
      %s735 = sshll.u32 [#allocation2], 4
      %s736 = int_to_ptr.vmem [resolvable:$true] %s735
      %741 = dma.vmem_to_hbm [thread:$0]  %s736, 1024, %s2, [#allocation3], 128, 128, 8
    $region13: #{tpu_custom_call.1} parent=1 // pred_fallthru
      _
    // Predicated region
    $region14: #{tpu_custom_call.1} parent=1 // pred_check
      _
    $region15: #{tpu_custom_call.1} parent=1 // pred_check_branch
      %743 = sbr.rel (0) target = $region17
    $region16: #{tpu_custom_call.1} parent=1 // pred_region
      %744 = dma.done [#allocation3], 1024
    $region17: #{tpu_custom_call.1} parent=1 // pred_fallthru
      _
    %745 = vsyncpa [#allocation3], 1

</llo_original>
